<compile_context>
chip_gen: v6e
topology: v6e:2x2x1
jax: 0.10.0
libtpu: 0.0.40
codegen_flags: <defaults>
</compile_context>

<pallas_src>
import functools

import jax
import jax.numpy as jnp
from jax.experimental import pallas as pl
from jax.experimental import pallas as _pl_unused  # noqa: F401
from jax.experimental.pallas import tpu as pltpu   # noqa: F401  (no TPU-specific params needed at this size)

# ----------------------------- sizes (small) -------------------------------
B = 2          # batch
N = 8          # points per sample (must stay a multiple of 8, see assert below)
D_IN = 32      # per-point input channels
H = 64         # hidden width
D_OUT = 32     # output feature dim
MOMENTUM = 0.999


# ------------------------- shared encoder math ------------------------------
def _encoder_math(x_flat, w1, b1, w2, b2, w3, b3, *, bsz, npts):
    """PointNet-style trunk on a batch-flattened point slab.

    x_flat: (bsz*npts, D_IN) f32 -> (bsz, D_OUT) f32.  All f32 (no bf16 casts:
    at these sizes the MXU is latency-bound, so reduced-precision operands only
    add VPU cast work — especially on v5e).  Used both inside the Pallas kernels
    and by the pure-JAX reference so the op sequence is identical.
    """
    h1 = jnp.maximum(
        jnp.dot(x_flat, w1, preferred_element_type=jnp.float32) + b1, 0.0)
    h2 = jnp.maximum(
        jnp.dot(h1, w2, preferred_element_type=jnp.float32) + b2, 0.0)
    # (bsz*npts, H) -> (bsz, npts, H); max over the sublane axis (cheap XLU reduce).
    pooled = jnp.max(h2.reshape(bsz, npts, -1), axis=1)              # (bsz, H)
    return jnp.dot(pooled, w3, preferred_element_type=jnp.float32) + b3


def _ema_update(k_refs, q_vals, n_refs, m):
    """param_k = m*param_k + (1-m)*param_q; write back through n_refs (aliased)."""
    new_params = []
    for kr, qv, nr in zip(k_refs, q_vals, n_refs):
        upd = kr[...] * m + qv * (1.0 - m)
        nr[...] = upd
        new_params.append(upd)
    return new_params


# ----------------------------- Pallas kernels --------------------------------
def _encoder_kernel(x_ref, w1_ref, b1_ref, w2_ref, b2_ref, w3_ref, b3_ref,
                    out_ref, *, bsz, npts):
    """Whole-batch trunk forward in a single invocation (no grid)."""
    out_ref[...] = _encoder_math(
        x_ref[...], w1_ref[...], b1_ref[...], w2_ref[...], b2_ref[...],
        w3_ref[...], b3_ref[...], bsz=bsz, npts=npts).astype(out_ref.dtype)


def _moco_fused_kernel(x_ref,
                       kw1_ref, kb1_ref, kw2_ref, kb2_ref, kw3_ref, kb3_ref,
                       qw1_ref, qb1_ref, qw2_ref, qb2_ref, qw3_ref, qb3_ref,
                       feat_ref,
                       nw1_ref, nb1_ref, nw2_ref, nb2_ref, nw3_ref, nb3_ref,
                       *, bsz, npts, m):
    """Standalone moco step: fused EMA of ALL key params + key-encoder forward."""
    k_refs = (kw1_ref, kb1_ref, kw2_ref, kb2_ref, kw3_ref, kb3_ref)
    q_vals = tuple(r[...] for r in
                   (qw1_ref, qb1_ref, qw2_ref, qb2_ref, qw3_ref, qb3_ref))
    n_refs = (nw1_ref, nb1_ref, nw2_ref, nb2_ref, nw3_ref, nb3_ref)
    new_params = _ema_update(k_refs, q_vals, n_refs, m)
    feat_ref[...] = _encoder_math(
        x_ref[...], *new_params, bsz=bsz, npts=npts).astype(feat_ref.dtype)


def _fused_pair_kernel(xq_ref, xk_ref,
                       qw1_ref, qb1_ref, qw2_ref, qb2_ref, qw3_ref, qb3_ref,
                       kw1_ref, kb1_ref, kw2_ref, kb2_ref, kw3_ref, kb3_ref,
                       feat_ref,
                       nw1_ref, nb1_ref, nw2_ref, nb2_ref, nw3_ref, nb3_ref,
                       *, bsz, npts, m):
    """One launch for the whole SSL step:
      1. EMA update key params from query params (write-back via aliased outputs)
      2. query-encoder forward on the query points (query params)
      3. key-encoder forward on the moco points (freshly-updated key params)
    Both feature blocks land in a single (2, bsz, dout) output slab."""
    q_vals = tuple(r[...] for r in
                   (qw1_ref, qb1_ref, qw2_ref, qb2_ref, qw3_ref, qb3_ref))
    k_refs = (kw1_ref, kb1_ref, kw2_ref, kb2_ref, kw3_ref, kb3_ref)
    n_refs = (nw1_ref, nb1_ref, nw2_ref, nb2_ref, nw3_ref, nb3_ref)
    new_k = _ema_update(k_refs, q_vals, n_refs, m)
    f_q = _encoder_math(xq_ref[...], *q_vals, bsz=bsz, npts=npts)
    f_k = _encoder_math(xk_ref[...], *new_k, bsz=bsz, npts=npts)
    feat_ref[0] = f_q.astype(feat_ref.dtype)
    feat_ref[1] = f_k.astype(feat_ref.dtype)


# ------------------------------ wrappers ------------------------------------
@jax.jit
def trunk_forward(x, params):
    """x: (B, N, D_IN) f32 -> (B, D_OUT) f32.  Single grid-less pallas_call."""
    w1, b1, w2, b2, w3, b3 = params
    bsz, npts, din = x.shape
    assert npts % 8 == 0, "npts must be a multiple of 8 (sublane-aligned max-pool)"
    dout = w3.shape[1]
    kern = functools.partial(_encoder_kernel, bsz=bsz, npts=npts)
    return pl.pallas_call(
        kern,
        out_shape=jax.ShapeDtypeStruct((bsz, dout), jnp.float32),
    )(x.reshape(bsz * npts, din), w1, b1, w2, b2, w3, b3)


@functools.partial(jax.jit, donate_argnums=(1,), static_argnames=("m",))
def moco_forward(x, params_k, params_q, *, m=MOMENTUM):
    """Standalone fused moco step (used when a 'moco' input is not paired with a
    preceding plain input).  params_k is DONATED so the EMA write-back via
    input_output_aliases reuses the caller's key-param buffers with no copy."""
    kw1, kb1, kw2, kb2, kw3, kb3 = params_k
    qw1, qb1, qw2, qb2, qw3, qb3 = params_q
    bsz, npts, din = x.shape
    assert npts % 8 == 0
    dout = kw3.shape[1]
    kern = functools.partial(_moco_fused_kernel, bsz=bsz, npts=npts, m=m)
    out_shape = (
        jax.ShapeDtypeStruct((bsz, dout), jnp.float32),
        *(jax.ShapeDtypeStruct(p.shape, p.dtype) for p in params_k),
    )
    feats, nw1, nb1, nw2, nb2, nw3, nb3 = pl.pallas_call(
        kern,
        out_shape=out_shape,
        input_output_aliases={i: i for i in range(1, 7)},   # k params -> new k params
    )(x.reshape(bsz * npts, din),
      kw1, kb1, kw2, kb2, kw3, kb3, qw1, qb1, qw2, qb2, qw3, qb3)
    return feats, (nw1, nb1, nw2, nb2, nw3, nb3)


@functools.partial(jax.jit, donate_argnums=(3,), static_argnames=("m",))
def fused_pair_forward(x_q, x_k, params_q, params_k, *, m=MOMENTUM):
    """ONE pallas_call for the (plain, moco) input pair.

    Returns (feats_q, feats_k, new_params_k).  params_k is DONATED; its buffers
    are reused for the EMA write-back (pallas inputs 8..13 alias outputs 1..6).
    """
    qw1, qb1, qw2, qb2, qw3, qb3 = params_q
    kw1, kb1, kw2, kb2, kw3, kb3 = params_k
    bsz, npts, din = x_q.shape
    assert x_k.shape == x_q.shape
    assert npts % 8 == 0
    dout = qw3.shape[1]
    kern = functools.partial(_fused_pair_kernel, bsz=bsz, npts=npts, m=m)
    out_shape = (
        jax.ShapeDtypeStruct((2, bsz, dout), jnp.float32),    # single feature slab
        *(jax.ShapeDtypeStruct(p.shape, p.dtype) for p in params_k),
    )
    feats, nw1, nb1, nw2, nb2, nw3, nb3 = pl.pallas_call(
        kern,
        out_shape=out_shape,
        input_output_aliases={8 + i: 1 + i for i in range(6)},
    )(x_q.reshape(bsz * npts, din), x_k.reshape(bsz * npts, din),
      qw1, qb1, qw2, qb2, qw3, qb3,
      kw1, kb1, kw2, kb2, kw3, kb3)
    return feats[0], feats[1], (nw1, nb1, nw2, nb2, nw3, nb3)


def make_trunk_params(key):
    """Deterministic trunk parameters (shapes follow the Linear layers)."""
    ks = jax.random.split(key, 3)
    w1 = jax.random.normal(ks[0], (D_IN, H), jnp.float32) * 0.05
    b1 = jnp.zeros((1, H), jnp.float32)
    w2 = jax.random.normal(ks[1], (H, H), jnp.float32) * 0.05
    b2 = jnp.zeros((1, H), jnp.float32)
    w3 = jax.random.normal(ks[2], (H, D_OUT), jnp.float32) * 0.05
    b3 = jnp.zeros((1, D_OUT), jnp.float32)
    return (w1, b1, w2, b2, w3, b3)


class BaseSSLMultiInputOutputModelPallas:
    """JAX/Pallas re-implementation of the forward pass."""

    def __init__(self, model_config):
        self.config = model_config
        self.model_input = model_config["model_input"]
        self.model_feature = model_config["model_feature"]
        self.m = MOMENTUM
        # trunk[0] = query encoder, trunk[1] = key encoder (exact copy, frozen).
        q_params = make_trunk_params(jax.random.PRNGKey(42))
        k_params = tuple(jnp.copy(p) for p in q_params)  # param_k.copy_(param_q)
        self.trunk = [q_params, k_params]
        # TODO(synk): DDP batch shuffle/unshuffle + concat_all_gather and the
        # ME.SparseTensor voxel path have no single-device Pallas equivalent.

    def forward(self, batch):
        n = len(self.model_input)
        all_outputs = [None] * n
        idx = 0
        while idx < n:
            key = self.model_input[idx]
            nxt = self.model_input[idx + 1] if idx + 1 < n else None
            if ("moco" not in key) and (nxt is not None) and ("moco" in nxt):
                # Common MoCo pattern: fuse query forward + EMA + key forward
                # into ONE pallas_call (halves launch overhead / weight DMAs).
                f_q, f_k, new_k = fused_pair_forward(
                    batch[key], batch[nxt],
                    self.trunk[idx], self.trunk[idx + 1], m=self.m)
                self.trunk[idx + 1] = new_k
                all_outputs[idx] = f_q
                all_outputs[idx + 1] = f_k
                idx += 2
            elif "moco" in key:
                feats, new_k = moco_forward(batch[key], self.trunk[idx],
                                            self.trunk[idx - 1], m=self.m)
                self.trunk[idx] = new_k
                all_outputs[idx] = feats
                idx += 1
            else:
                all_outputs[idx] = trunk_forward(batch[key], self.trunk[idx])
                idx += 1
        return all_outputs


# --------------------------- pure-JAX reference ------------------------------
def trunk_forward_ref(x, params):
    bsz, npts, din = x.shape
    return _encoder_math(x.reshape(bsz * npts, din), *params,
                         bsz=bsz, npts=npts)


def momentum_update_ref(params_k, params_q, m=MOMENTUM):
    return tuple(pk * m + pq * (1.0 - m) for pk, pq in zip(params_k, params_q))


if __name__ == "__main__":
    key = jax.random.PRNGKey(0)
    k1, k2 = jax.random.split(key)
    batch = {
        "points":      jax.random.normal(k1, (B, N, D_IN), jnp.float32),
        "points_moco": jax.random.normal(k2, (B, N, D_IN), jnp.float32),
    }

    model_config = {
        "arch_point": "pointnet_mini",
        "args_point": {},
        "model_input": ["points", "points_moco"],
        "model_feature": [["global_feat"], ["global_feat"]],
    }
    model = BaseSSLMultiInputOutputModelPallas(model_config)
    q_params = model.trunk[0]

    # The key params are DONATED by the fused call, so compute every reference
    # that needs the pre-update key params BEFORE running forward().
    ref_k_params = momentum_update_ref(model.trunk[1], q_params, MOMENTUM)

    outputs = model.forward(batch)
    outputs = [jax.block_until_ready(o) for o in outputs]

    # ---- correctness: query / key forward against the pure-JAX reference ----
    assert outputs[0].shape == (B, D_OUT) and outputs[1].shape == (B, D_OUT)
    ref_q = trunk_forward_ref(batch["points"], q_params)
    ref_k = trunk_forward_ref(batch["points_moco"], model.trunk[1])  # post-EMA params
    assert jnp.allclose(outputs[0], ref_q, atol=2e-3, rtol=2e-3)
    assert jnp.allclose(outputs[1], ref_k, atol=2e-3, rtol=2e-3)

    # ---- correctness: EMA write-back (degenerate here since pk == pq) --------
    assert all(jnp.allclose(a, b, atol=1e-6, rtol=1e-6)
               for a, b in zip(model.trunk[1], ref_k_params))

    # ---- standalone (non-fused) query kernel path ----------------------------
    fq_single = jax.block_until_ready(trunk_forward(batch["points"], q_params))
    assert jnp.allclose(fq_single, ref_q, atol=2e-3, rtol=2e-3)

    # ---- extra EMA-path validation with pk != pq (not a no-op) --------------
    k_pert = tuple(p * 1.05 + 0.01 for p in q_params)
    # k_pert will be donated by moco_forward -> compute references first.
    ref_new_k = momentum_update_ref(k_pert, q_params, MOMENTUM)
    ref_feats_p = trunk_forward_ref(batch["points_moco"], ref_new_k)
    feats_p, new_k_p = moco_forward(batch["points_moco"], k_pert, q_params,
                                    m=MOMENTUM)
    feats_p = jax.block_until_ready(feats_p)
    assert all(jnp.allclose(a, b, atol=1e-6, rtol=1e-6)
               for a, b in zip(new_k_p, ref_new_k))
    assert jnp.allclose(feats_p, ref_feats_p, atol=2e-3, rtol=2e-3)

    print("KERNEL_OK")
</pallas_src>

<mosaic_0001>
module attributes {stable_mosaic.version = 11 : i64} {
  func.func @_fused_pair_kernel(%arg0: memref<16x32xf32, #tpu.memory_space<vmem>>, %arg1: memref<16x32xf32, #tpu.memory_space<vmem>>, %arg2: memref<32x64xf32, #tpu.memory_space<vmem>>, %arg3: memref<1x64xf32, #tpu.memory_space<vmem>>, %arg4: memref<64x64xf32, #tpu.memory_space<vmem>>, %arg5: memref<1x64xf32, #tpu.memory_space<vmem>>, %arg6: memref<64x32xf32, #tpu.memory_space<vmem>>, %arg7: memref<1x32xf32, #tpu.memory_space<vmem>>, %arg8: memref<32x64xf32, #tpu.memory_space<vmem>>, %arg9: memref<1x64xf32, #tpu.memory_space<vmem>>, %arg10: memref<64x64xf32, #tpu.memory_space<vmem>>, %arg11: memref<1x64xf32, #tpu.memory_space<vmem>>, %arg12: memref<64x32xf32, #tpu.memory_space<vmem>>, %arg13: memref<1x32xf32, #tpu.memory_space<vmem>>, %arg14: memref<2x2x32xf32, #tpu.memory_space<vmem>>, %arg15: memref<32x64xf32, #tpu.memory_space<vmem>>, %arg16: memref<1x64xf32, #tpu.memory_space<vmem>>, %arg17: memref<64x64xf32, #tpu.memory_space<vmem>>, %arg18: memref<1x64xf32, #tpu.memory_space<vmem>>, %arg19: memref<64x32xf32, #tpu.memory_space<vmem>>, %arg20: memref<1x32xf32, #tpu.memory_space<vmem>>) attributes {dimension_semantics = [], scalar_prefetch = 0 : i64, scratch_operands = 0 : i64, tpu.core_type = #tpu.core_type<tc>} {
    %c0 = arith.constant 0 : index
    %c0_0 = arith.constant 0 : index
    %0 = vector.load %arg2[%c0, %c0_0] : memref<32x64xf32, #tpu.memory_space<vmem>>, vector<32x64xf32>
    %c0_1 = arith.constant 0 : index
    %c0_2 = arith.constant 0 : index
    %1 = vector.load %arg3[%c0_1, %c0_2] : memref<1x64xf32, #tpu.memory_space<vmem>>, vector<1x64xf32>
    %c0_3 = arith.constant 0 : index
    %c0_4 = arith.constant 0 : index
    %2 = vector.load %arg4[%c0_3, %c0_4] : memref<64x64xf32, #tpu.memory_space<vmem>>, vector<64x64xf32>
    %c0_5 = arith.constant 0 : index
    %c0_6 = arith.constant 0 : index
    %3 = vector.load %arg5[%c0_5, %c0_6] : memref<1x64xf32, #tpu.memory_space<vmem>>, vector<1x64xf32>
    %c0_7 = arith.constant 0 : index
    %c0_8 = arith.constant 0 : index
    %4 = vector.load %arg6[%c0_7, %c0_8] : memref<64x32xf32, #tpu.memory_space<vmem>>, vector<64x32xf32>
    %c0_9 = arith.constant 0 : index
    %c0_10 = arith.constant 0 : index
    %5 = vector.load %arg7[%c0_9, %c0_10] : memref<1x32xf32, #tpu.memory_space<vmem>>, vector<1x32xf32>
    %c0_11 = arith.constant 0 : index
    %c0_12 = arith.constant 0 : index
    %6 = vector.load %arg8[%c0_11, %c0_12] : memref<32x64xf32, #tpu.memory_space<vmem>>, vector<32x64xf32>
    %cst = arith.constant 9.990000e-01 : f32
    %7 = vector.broadcast %cst : f32 to vector<32x64xf32>
    %8 = arith.mulf %6, %7 : vector<32x64xf32>
    %cst_13 = arith.constant 1.000000e-03 : f32
    %9 = vector.broadcast %cst_13 : f32 to vector<32x64xf32>
    %10 = arith.mulf %0, %9 : vector<32x64xf32>
    %11 = arith.addf %8, %10 : vector<32x64xf32>
    %c0_14 = arith.constant 0 : index
    %c0_15 = arith.constant 0 : index
    %12 = vector.load %arg15[%c0_14, %c0_15] : memref<32x64xf32, #tpu.memory_space<vmem>>, vector<32x64xf32>
    tpu.vector_store %arg15[%c0_14, %c0_15], %11 {strides = array<i32>} : memref<32x64xf32, #tpu.memory_space<vmem>>, vector<32x64xf32>,
    %c0_16 = arith.constant 0 : index
    %c0_17 = arith.constant 0 : index
    %13 = vector.load %arg9[%c0_16, %c0_17] : memref<1x64xf32, #tpu.memory_space<vmem>>, vector<1x64xf32>
    %cst_18 = arith.constant 9.990000e-01 : f32
    %14 = vector.broadcast %cst_18 : f32 to vector<1x64xf32>
    %15 = arith.mulf %13, %14 : vector<1x64xf32>
    %cst_19 = arith.constant 1.000000e-03 : f32
    %16 = vector.broadcast %cst_19 : f32 to vector<1x64xf32>
    %17 = arith.mulf %1, %16 : vector<1x64xf32>
    %18 = arith.addf %15, %17 : vector<1x64xf32>
    %c0_20 = arith.constant 0 : index
    %c0_21 = arith.constant 0 : index
    %19 = vector.load %arg16[%c0_20, %c0_21] : memref<1x64xf32, #tpu.memory_space<vmem>>, vector<1x64xf32>
    tpu.vector_store %arg16[%c0_20, %c0_21], %18 {strides = array<i32>} : memref<1x64xf32, #tpu.memory_space<vmem>>, vector<1x64xf32>,
    %c0_22 = arith.constant 0 : index
    %c0_23 = arith.constant 0 : index
    %20 = vector.load %arg10[%c0_22, %c0_23] : memref<64x64xf32, #tpu.memory_space<vmem>>, vector<64x64xf32>
    %cst_24 = arith.constant 9.990000e-01 : f32
    %21 = vector.broadcast %cst_24 : f32 to vector<64x64xf32>
    %22 = arith.mulf %20, %21 : vector<64x64xf32>
    %cst_25 = arith.constant 1.000000e-03 : f32
    %23 = vector.broadcast %cst_25 : f32 to vector<64x64xf32>
    %24 = arith.mulf %2, %23 : vector<64x64xf32>
    %25 = arith.addf %22, %24 : vector<64x64xf32>
    %c0_26 = arith.constant 0 : index
    %c0_27 = arith.constant 0 : index
    %26 = vector.load %arg17[%c0_26, %c0_27] : memref<64x64xf32, #tpu.memory_space<vmem>>, vector<64x64xf32>
    tpu.vector_store %arg17[%c0_26, %c0_27], %25 {strides = array<i32>} : memref<64x64xf32, #tpu.memory_space<vmem>>, vector<64x64xf32>,
    %c0_28 = arith.constant 0 : index
    %c0_29 = arith.constant 0 : index
    %27 = vector.load %arg11[%c0_28, %c0_29] : memref<1x64xf32, #tpu.memory_space<vmem>>, vector<1x64xf32>
    %cst_30 = arith.constant 9.990000e-01 : f32
    %28 = vector.broadcast %cst_30 : f32 to vector<1x64xf32>
    %29 = arith.mulf %27, %28 : vector<1x64xf32>
    %cst_31 = arith.constant 1.000000e-03 : f32
    %30 = vector.broadcast %cst_31 : f32 to vector<1x64xf32>
    %31 = arith.mulf %3, %30 : vector<1x64xf32>
    %32 = arith.addf %29, %31 : vector<1x64xf32>
    %c0_32 = arith.constant 0 : index
    %c0_33 = arith.constant 0 : index
    %33 = vector.load %arg18[%c0_32, %c0_33] : memref<1x64xf32, #tpu.memory_space<vmem>>, vector<1x64xf32>
    tpu.vector_store %arg18[%c0_32, %c0_33], %32 {strides = array<i32>} : memref<1x64xf32, #tpu.memory_space<vmem>>, vector<1x64xf32>,
    %c0_34 = arith.constant 0 : index
    %c0_35 = arith.constant 0 : index
    %34 = vector.load %arg12[%c0_34, %c0_35] : memref<64x32xf32, #tpu.memory_space<vmem>>, vector<64x32xf32>
    %cst_36 = arith.constant 9.990000e-01 : f32
    %35 = vector.broadcast %cst_36 : f32 to vector<64x32xf32>
    %36 = arith.mulf %34, %35 : vector<64x32xf32>
    %cst_37 = arith.constant 1.000000e-03 : f32
    %37 = vector.broadcast %cst_37 : f32 to vector<64x32xf32>
    %38 = arith.mulf %4, %37 : vector<64x32xf32>
    %39 = arith.addf %36, %38 : vector<64x32xf32>
    %c0_38 = arith.constant 0 : index
    %c0_39 = arith.constant 0 : index
    %40 = vector.load %arg19[%c0_38, %c0_39] : memref<64x32xf32, #tpu.memory_space<vmem>>, vector<64x32xf32>
    tpu.vector_store %arg19[%c0_38, %c0_39], %39 {strides = array<i32>} : memref<64x32xf32, #tpu.memory_space<vmem>>, vector<64x32xf32>,
    %c0_40 = arith.constant 0 : index
    %c0_41 = arith.constant 0 : index
    %41 = vector.load %arg13[%c0_40, %c0_41] : memref<1x32xf32, #tpu.memory_space<vmem>>, vector<1x32xf32>
    %cst_42 = arith.constant 9.990000e-01 : f32
    %42 = vector.broadcast %cst_42 : f32 to vector<1x32xf32>
    %43 = arith.mulf %41, %42 : vector<1x32xf32>
    %cst_43 = arith.constant 1.000000e-03 : f32
    %44 = vector.broadcast %cst_43 : f32 to vector<1x32xf32>
    %45 = arith.mulf %5, %44 : vector<1x32xf32>
    %46 = arith.addf %43, %45 : vector<1x32xf32>
    %c0_44 = arith.constant 0 : index
    %c0_45 = arith.constant 0 : index
    %47 = vector.load %arg20[%c0_44, %c0_45] : memref<1x32xf32, #tpu.memory_space<vmem>>, vector<1x32xf32>
    tpu.vector_store %arg20[%c0_44, %c0_45], %46 {strides = array<i32>} : memref<1x32xf32, #tpu.memory_space<vmem>>, vector<1x32xf32>,
    %c0_46 = arith.constant 0 : index
    %c0_47 = arith.constant 0 : index
    %48 = vector.load %arg0[%c0_46, %c0_47] : memref<16x32xf32, #tpu.memory_space<vmem>>, vector<16x32xf32>
    %cst_48 = arith.constant dense<0.000000e+00> : vector<16x64xf32>
    %49 = tpu.matmul %48, %0, %cst_48 {dimension_numbers = #tpu.dot_dimension_numbers<[1], [0], [0], [1], [0, 0, 1, 1], [], []>} : vector<16x32xf32>, vector<32x64xf32>, vector<16x64xf32> -> vector<16x64xf32>
    %50 = vector.broadcast %1 : vector<1x64xf32> to vector<16x64xf32>
    %51 = arith.addf %49, %50 : vector<16x64xf32>
    %cst_49 = arith.constant 0.000000e+00 : f32
    %52 = vector.broadcast %cst_49 : f32 to vector<16x64xf32>
    %53 = arith.maximumf %51, %52 : vector<16x64xf32>
    %cst_50 = arith.constant dense<0.000000e+00> : vector<16x64xf32>
    %54 = tpu.matmul %53, %2, %cst_50 {dimension_numbers = #tpu.dot_dimension_numbers<[1], [0], [0], [1], [0, 0, 1, 1], [], []>} : vector<16x64xf32>, vector<64x64xf32>, vector<16x64xf32> -> vector<16x64xf32>
    %55 = vector.broadcast %3 : vector<1x64xf32> to vector<16x64xf32>
    %56 = arith.addf %54, %55 : vector<16x64xf32>
    %cst_51 = arith.constant 0.000000e+00 : f32
    %57 = vector.broadcast %cst_51 : f32 to vector<16x64xf32>
    %58 = arith.maximumf %56, %57 : vector<16x64xf32>
    %59 = vector.shape_cast %58 : vector<16x64xf32> to vector<2x8x64xf32>
    %cst_52 = arith.constant dense<0xFF800000> : vector<2x64xf32>
    %60 = vector.multi_reduction <maximumf>, %59, %cst_52 [1] : vector<2x8x64xf32> to vector<2x64xf32>
    %cst_53 = arith.constant dense<0.000000e+00> : vector<2x32xf32>
    %61 = tpu.matmul %60, %4, %cst_53 {dimension_numbers = #tpu.dot_dimension_numbers<[1], [0], [0], [1], [0, 0, 1, 1], [], []>} : vector<2x64xf32>, vector<64x32xf32>, vector<2x32xf32> -> vector<2x32xf32>
    %62 = vector.broadcast %5 : vector<1x32xf32> to vector<2x32xf32>
    %63 = arith.addf %61, %62 : vector<2x32xf32>
    %c0_54 = arith.constant 0 : index
    %c0_55 = arith.constant 0 : index
    %64 = vector.load %arg1[%c0_54, %c0_55] : memref<16x32xf32, #tpu.memory_space<vmem>>, vector<16x32xf32>
    %cst_56 = arith.constant dense<0.000000e+00> : vector<16x64xf32>
    %65 = tpu.matmul %64, %11, %cst_56 {dimension_numbers = #tpu.dot_dimension_numbers<[1], [0], [0], [1], [0, 0, 1, 1], [], []>} : vector<16x32xf32>, vector<32x64xf32>, vector<16x64xf32> -> vector<16x64xf32>
    %66 = vector.broadcast %18 : vector<1x64xf32> to vector<16x64xf32>
    %67 = arith.addf %65, %66 : vector<16x64xf32>
    %cst_57 = arith.constant 0.000000e+00 : f32
    %68 = vector.broadcast %cst_57 : f32 to vector<16x64xf32>
    %69 = arith.maximumf %67, %68 : vector<16x64xf32>
    %cst_58 = arith.constant dense<0.000000e+00> : vector<16x64xf32>
    %70 = tpu.matmul %69, %25, %cst_58 {dimension_numbers = #tpu.dot_dimension_numbers<[1], [0], [0], [1], [0, 0, 1, 1], [], []>} : vector<16x64xf32>, vector<64x64xf32>, vector<16x64xf32> -> vector<16x64xf32>
    %71 = vector.broadcast %32 : vector<1x64xf32> to vector<16x64xf32>
    %72 = arith.addf %70, %71 : vector<16x64xf32>
    %cst_59 = arith.constant 0.000000e+00 : f32
    %73 = vector.broadcast %cst_59 : f32 to vector<16x64xf32>
    %74 = arith.maximumf %72, %73 : vector<16x64xf32>
    %75 = vector.shape_cast %74 : vector<16x64xf32> to vector<2x8x64xf32>
    %cst_60 = arith.constant dense<0xFF800000> : vector<2x64xf32>
    %76 = vector.multi_reduction <maximumf>, %75, %cst_60 [1] : vector<2x8x64xf32> to vector<2x64xf32>
    %cst_61 = arith.constant dense<0.000000e+00> : vector<2x32xf32>
    %77 = tpu.matmul %76, %39, %cst_61 {dimension_numbers = #tpu.dot_dimension_numbers<[1], [0], [0], [1], [0, 0, 1, 1], [], []>} : vector<2x64xf32>, vector<64x32xf32>, vector<2x32xf32> -> vector<2x32xf32>
    %78 = vector.broadcast %46 : vector<1x32xf32> to vector<2x32xf32>
    %79 = arith.addf %77, %78 : vector<2x32xf32>
    %c0_62 = arith.constant 0 : index
    %c0_63 = arith.constant 0 : index
    %c0_64 = arith.constant 0 : index
    %80 = vector.load %arg14[%c0_62, %c0_63, %c0_64] : memref<2x2x32xf32, #tpu.memory_space<vmem>>, vector<1x2x32xf32>
    %81 = vector.shape_cast %80 : vector<1x2x32xf32> to vector<2x32xf32>
    %82 = vector.shape_cast %63 : vector<2x32xf32> to vector<1x2x32xf32>
    tpu.vector_store %arg14[%c0_62, %c0_63, %c0_64], %82 {strides = array<i32>} : memref<2x2x32xf32, #tpu.memory_space<vmem>>, vector<1x2x32xf32>,
    %c1 = arith.constant 1 : index
    %c0_65 = arith.constant 0 : index
    %c0_66 = arith.constant 0 : index
    %83 = vector.load %arg14[%c1, %c0_65, %c0_66] : memref<2x2x32xf32, #tpu.memory_space<vmem>>, vector<1x2x32xf32>
    %84 = vector.shape_cast %83 : vector<1x2x32xf32> to vector<2x32xf32>
    %85 = vector.shape_cast %79 : vector<2x32xf32> to vector<1x2x32xf32>
    tpu.vector_store %arg14[%c1, %c0_65, %c0_66], %85 {strides = array<i32>} : memref<2x2x32xf32, #tpu.memory_space<vmem>>, vector<1x2x32xf32>,
    return
  }
}

</mosaic_0001>

<llo_original>
// kernel: fused_pair_forward.1
$region0: #{fused_pair_forward.1}
  #allocation0 [shape = 'u32[]', space=smem, size = 0x4, offset = 0x4, fixed_abs, tag = 'smem constant byte address 0x4 - core index']
  #allocation1 [shape = 'u32[144,128]{1,0:T(1,128)}', space=vmem, size = 0x12000, scoped, tag = 'internal scratch']
  %s0 = inlined_call_operand.hbm [shape: f32[16,32], index: 0, kind: input, shape index: {}]
  %s1 = inlined_call_operand.hbm [shape: f32[16,32], index: 1, kind: input, shape index: {}]
  %s2 = inlined_call_operand.vmem [shape: f32[32,64], index: 2, kind: input, shape index: {}]
  %s3 = inlined_call_operand.vmem [shape: f32[1,64], index: 3, kind: input, shape index: {}]
  %s4 = inlined_call_operand.vmem [shape: f32[64,64], index: 4, kind: input, shape index: {}]
  %s5 = inlined_call_operand.vmem [shape: f32[1,64], index: 5, kind: input, shape index: {}]
  %s6 = inlined_call_operand.vmem [shape: f32[64,32], index: 6, kind: input, shape index: {}]
  %s7 = inlined_call_operand.vmem [shape: f32[1,32], index: 7, kind: input, shape index: {}]
  %s8 = inlined_call_operand.hbm [shape: f32[32,64], index: 8, kind: input, shape index: {}, may-alias: {8,15}]
  %s9 = inlined_call_operand.vmem [shape: f32[1,64], index: 9, kind: input, shape index: {}, may-alias: {9,16}]
  %s10 = inlined_call_operand.vmem [shape: f32[64,64], index: 10, kind: input, shape index: {}, may-alias: {10,17}]
  %s11 = inlined_call_operand.vmem [shape: f32[1,64], index: 11, kind: input, shape index: {}, may-alias: {11,18}]
  %s12 = inlined_call_operand.vmem [shape: f32[64,32], index: 12, kind: input, shape index: {}, may-alias: {12,19}]
  %s13 = inlined_call_operand.vmem [shape: f32[1,32], index: 13, kind: input, shape index: {}, may-alias: {13,20}]
  %s14 = inlined_call_operand.vmem [shape: f32[2,2,32], index: 14, kind: output, shape index: {0}]
  %s15 = inlined_call_operand.hbm [shape: f32[32,64], index: 15, kind: output, shape index: {1}, may-alias: {8,15}]
  %s16 = inlined_call_operand.vmem [shape: f32[1,64], index: 16, kind: output, shape index: {2}, may-alias: {9,16}]
  %s17 = inlined_call_operand.vmem [shape: f32[64,64], index: 17, kind: output, shape index: {3}, may-alias: {10,17}]
  %s18 = inlined_call_operand.vmem [shape: f32[1,64], index: 18, kind: output, shape index: {4}, may-alias: {11,18}]
  %s19 = inlined_call_operand.vmem [shape: f32[64,32], index: 19, kind: output, shape index: {5}, may-alias: {12,19}]
  %s20 = inlined_call_operand.vmem [shape: f32[1,32], index: 20, kind: output, shape index: {6}, may-alias: {13,20}]
  %21 = xla_tuple %s14, %s15, %s16, %s17, %s18, %s19, %s20
  %s22 = sld [smem:[#allocation0]]
  $region126: #{fused_pair_forward.1} parent=0
    _
  %s24 = ssub.s32 1, %s22
  %s25 = scalar_select 0, %s24, %s22
  $region1: #{fused_pair_forward.1} parent=0
    #allocation2 [shape = 'u8[8192]{0}', space=vmem, size = 0x2000, scoped, tag = 'input window, operand 0, single buffered']
    #allocation3 [shape = 's32[1]{0}', space=sflag, size = 0x4, scoped, tag = 'scoped memory for fused_pair_forward.1']
    #allocation4 [shape = 's32[1]{0}', space=sflag, size = 0x4, scoped, tag = 'scoped memory for fused_pair_forward.1']
    #allocation5 [shape = 'u8[8192]{0}', space=vmem, size = 0x2000, scoped, tag = 'input window, operand 1, single buffered']
    #allocation6 [shape = 's32[1]{0}', space=sflag, size = 0x4, scoped, tag = 'scoped memory for fused_pair_forward.1']
    #allocation7 [shape = 'u8[16384]{0}', space=vmem, size = 0x4000, scoped, tag = 'input window, operand 8, single buffered']
    #allocation8 [shape = 'u8[16384]{0}', space=vmem, size = 0x4000, scoped, tag = 'output window, operand 1, single buffered']
    %26 = vsyncpa [#allocation3], 0
    %27 = vsyncpa [#allocation6], 0
    %28 = vsyncpa [#allocation4], 0
    // Predicated region
    $region2: #{fused_pair_forward.1} parent=1 // pred_check
      _
    $region3: #{fused_pair_forward.1} parent=1 // pred_check_branch
      %30 = sbr.rel (0) target = $region5
    $region4: #{fused_pair_forward.1} parent=1 // pred_region
      %s32 = ssub.s32 256, 256
      %33 = vsyncadd [#allocation3], %s32
      %s34 = sshll.u32 [#allocation2], 4
      %s35 = int_to_ptr.vmem [resolvable:$true] %s34
      %40 = dma.hbm_to_vmem [thread:$0]  %s0, 256, %s35, [#allocation3], 128, 128, 8
    $region5: #{fused_pair_forward.1} parent=1 // pred_fallthru
      _
    // Predicated region
    $region6: #{fused_pair_forward.1} parent=1 // pred_check
      _
    $region7: #{fused_pair_forward.1} parent=1 // pred_check_branch
      %42 = sbr.rel (0) target = $region9
    $region8: #{fused_pair_forward.1} parent=1 // pred_region
      %s44 = ssub.s32 256, 256
      %45 = vsyncadd [#allocation6], %s44
      %s46 = sshll.u32 [#allocation5], 4
      %s47 = int_to_ptr.vmem [resolvable:$true] %s46
      %52 = dma.hbm_to_vmem [thread:$0]  %s1, 256, %s47, [#allocation6], 128, 128, 8
    $region9: #{fused_pair_forward.1} parent=1 // pred_fallthru
      _
    // Predicated region
    $region10: #{fused_pair_forward.1} parent=1 // pred_check
      _
    $region11: #{fused_pair_forward.1} parent=1 // pred_check_branch
      %54 = sbr.rel (0) target = $region13
    $region12: #{fused_pair_forward.1} parent=1 // pred_region
      _
    $region13: #{fused_pair_forward.1} parent=1 // pred_fallthru
      _
    // Predicated region
    $region14: #{fused_pair_forward.1} parent=1 // pred_check
      _
    $region15: #{fused_pair_forward.1} parent=1 // pred_check_branch
      %56 = sbr.rel (0) target = $region17
    $region16: #{fused_pair_forward.1} parent=1 // pred_region
      _
    $region17: #{fused_pair_forward.1} parent=1 // pred_fallthru
      _
    // Predicated region
    $region18: #{fused_pair_forward.1} parent=1 // pred_check
      _
    $region19: #{fused_pair_forward.1} parent=1 // pred_check_branch
      %58 = sbr.rel (0) target = $region21
    $region20: #{fused_pair_forward.1} parent=1 // pred_region
      _
    $region21: #{fused_pair_forward.1} parent=1 // pred_fallthru
      _
    // Predicated region
    $region22: #{fused_pair_forward.1} parent=1 // pred_check
      _
    $region23: #{fused_pair_forward.1} parent=1 // pred_check_branch
      %60 = sbr.rel (0) target = $region25
    $region24: #{fused_pair_forward.1} parent=1 // pred_region
      _
    $region25: #{fused_pair_forward.1} parent=1 // pred_fallthru
      _
    // Predicated region
    $region26: #{fused_pair_forward.1} parent=1 // pred_check
      _
    $region27: #{fused_pair_forward.1} parent=1 // pred_check_branch
      %62 = sbr.rel (0) target = $region29
    $region28: #{fused_pair_forward.1} parent=1 // pred_region
      _
    $region29: #{fused_pair_forward.1} parent=1 // pred_fallthru
      _
    // Predicated region
    $region30: #{fused_pair_forward.1} parent=1 // pred_check
      _
    $region31: #{fused_pair_forward.1} parent=1 // pred_check_branch
      %64 = sbr.rel (0) target = $region33
    $region32: #{fused_pair_forward.1} parent=1 // pred_region
      _
    $region33: #{fused_pair_forward.1} parent=1 // pred_fallthru
      _
    // Predicated region
    $region34: #{fused_pair_forward.1} parent=1 // pred_check
      _
    $region35: #{fused_pair_forward.1} parent=1 // pred_check_branch
      %66 = sbr.rel (0) target = $region37
    $region36: #{fused_pair_forward.1} parent=1 // pred_region
      %s68 = ssub.s32 512, 512
      %69 = vsyncadd [#allocation6], %s68
      %s70 = sshll.u32 [#allocation7], 4
      %s71 = int_to_ptr.vmem [resolvable:$true] %s70
      %76 = dma.hbm_to_vmem [thread:$0]  %s8, 512, %s71, [#allocation6], 128, 128, 8
    $region37: #{fused_pair_forward.1} parent=1 // pred_fallthru
      _
    // Predicated region
    $region38: #{fused_pair_forward.1} parent=1 // pred_check
      _
    $region39: #{fused_pair_forward.1} parent=1 // pred_check_branch
      %78 = sbr.rel (0) target = $region41
    $region40: #{fused_pair_forward.1} parent=1 // pred_region
      _
    $region41: #{fused_pair_forward.1} parent=1 // pred_fallthru
      _
    // Predicated region
    $region42: #{fused_pair_forward.1} parent=1 // pred_check
      _
    $region43: #{fused_pair_forward.1} parent=1 // pred_check_branch
      %80 = sbr.rel (0) target = $region45
    $region44: #{fused_pair_forward.1} parent=1 // pred_region
      _
    $region45: #{fused_pair_forward.1} parent=1 // pred_fallthru
      _
    // Predicated region
    $region46: #{fused_pair_forward.1} parent=1 // pred_check
      _
    $region47: #{fused_pair_forward.1} parent=1 // pred_check_branch
      %82 = sbr.rel (0) target = $region49
    $region48: #{fused_pair_forward.1} parent=1 // pred_region
      _
    $region49: #{fused_pair_forward.1} parent=1 // pred_fallthru
      _
    // Predicated region
    $region50: #{fused_pair_forward.1} parent=1 // pred_check
      _
    $region51: #{fused_pair_forward.1} parent=1 // pred_check_branch
      %84 = sbr.rel (0) target = $region53
    $region52: #{fused_pair_forward.1} parent=1 // pred_region
      _
    $region53: #{fused_pair_forward.1} parent=1 // pred_fallthru
      _
    // Predicated region
    $region54: #{fused_pair_forward.1} parent=1 // pred_check
      _
    $region55: #{fused_pair_forward.1} parent=1 // pred_check_branch
      %86 = sbr.rel (0) target = $region57
    $region56: #{fused_pair_forward.1} parent=1 // pred_region
      _
    $region57: #{fused_pair_forward.1} parent=1 // pred_fallthru
      _
    // Predicated region
    $region58: #{fused_pair_forward.1} parent=1 // pred_check
      _
    $region59: #{fused_pair_forward.1} parent=1 // pred_check_branch
      %88 = sbr.rel (0) target = $region61
    $region60: #{fused_pair_forward.1} parent=1 // pred_region
      %89 = dma.done [#allocation3], 256
    $region61: #{fused_pair_forward.1} parent=1 // pred_fallthru
      _
    // Predicated region
    $region62: #{fused_pair_forward.1} parent=1 // pred_check
      _
    $region63: #{fused_pair_forward.1} parent=1 // pred_check_branch
      %91 = sbr.rel (0) target = $region65
    $region64: #{fused_pair_forward.1} parent=1 // pred_region
      %92 = dma.done [#allocation6], 256
    $region65: #{fused_pair_forward.1} parent=1 // pred_fallthru
      _
    // Predicated region
    $region66: #{fused_pair_forward.1} parent=1 // pred_check
      _
    $region67: #{fused_pair_forward.1} parent=1 // pred_check_branch
      %94 = sbr.rel (0) target = $region69
    $region68: #{fused_pair_forward.1} parent=1 // pred_region
      %95 = dma.done [#allocation6], 512
    $region69: #{fused_pair_forward.1} parent=1 // pred_fallthru
      _
    %v96 = vld [vmem:[%s2] sm:$0xff]
    %v97 = vld [vmem:[%s2 + $0x8] sm:$0xff]
    %v98 = vld [vmem:[%s2 + $0x10] sm:$0xff]
    %v99 = vld [vmem:[%s2 + $0x18] sm:$0xff]
    %v100 = vld [vmem:[%s3] sm:$0x1]
    %v101 = vld [vmem:[%s4] sm:$0xff]
    %v102 = vld [vmem:[%s4 + $0x8] sm:$0xff]
    %v103 = vld [vmem:[%s4 + $0x10] sm:$0xff]
    %v104 = vld [vmem:[%s4 + $0x18] sm:$0xff]
    %v105 = vld [vmem:[%s4 + $0x20] sm:$0xff]
    %v106 = vld [vmem:[%s4 + $0x28] sm:$0xff]
    %v107 = vld [vmem:[%s4 + $0x30] sm:$0xff]
    %v108 = vld [vmem:[%s4 + $0x38] sm:$0xff]
    %v109 = vld [vmem:[%s5] sm:$0x1]
    %v110 = vld [vmem:[%s6] sm:$0xff]
    %v111 = vld [vmem:[%s6 + $0x8] sm:$0xff]
    %v112 = vld [vmem:[%s6 + $0x10] sm:$0xff]
    %v113 = vld [vmem:[%s6 + $0x18] sm:$0xff]
    %v114 = vld [vmem:[%s6 + $0x20] sm:$0xff]
    %v115 = vld [vmem:[%s6 + $0x28] sm:$0xff]
    %v116 = vld [vmem:[%s6 + $0x30] sm:$0xff]
    %v117 = vld [vmem:[%s6 + $0x38] sm:$0xff]
    %v118 = vld [vmem:[%s7] sm:$0x1]
    %v119 = vld [vmem:[#allocation7] sm:$0xff]
    %v120 = vld [vmem:[#allocation7 + $0x8] sm:$0xff]
    %v121 = vld [vmem:[#allocation7 + $0x10] sm:$0xff]
    %v122 = vld [vmem:[#allocation7 + $0x18] sm:$0xff]
    %v123 = vmul.f32 %v119, 0.999
    %v124 = vmul.f32 %v120, 0.999
    %v125 = vmul.f32 %v121, 0.999
    %v126 = vmul.f32 %v122, 0.999
    %v127 = vmul.f32 %v96, 0.001
    %v128 = vmul.f32 %v97, 0.001
    %v129 = vmul.f32 %v98, 0.001
    %v130 = vmul.f32 %v99, 0.001
    %v131 = vadd.f32 %v123, %v127
    %v132 = vadd.f32 %v124, %v128
    %v133 = vadd.f32 %v125, %v129
    %v134 = vadd.f32 %v126, %v130
    %vm135 = vcmask 523264
    %136 = vst.msk [vmem:[#allocation8] sm:$0xff] %vm135, %v131
    %137 = vst.msk [vmem:[#allocation8 + $0x8] sm:$0xff] %vm135, %v132
    %138 = vst.msk [vmem:[#allocation8 + $0x10] sm:$0xff] %vm135, %v133
    %139 = vst.msk [vmem:[#allocation8 + $0x18] sm:$0xff] %vm135, %v134
    %v140 = vld [vmem:[%s9] sm:$0x1]
    %v141 = vmul.f32 %v140, 0.999
    %v142 = vmul.f32 %v100, 0.001
    %v143 = vadd.f32 %v141, %v142
    %vm144 = vcmask 516096
    %145 = vst.msk [vmem:[%s16] sm:$0x1] %vm144, %v143
    %v146 = vld [vmem:[%s10] sm:$0xff]
    %v147 = vld [vmem:[%s10 + $0x8] sm:$0xff]
    %v148 = vld [vmem:[%s10 + $0x10] sm:$0xff]
    %v149 = vld [vmem:[%s10 + $0x18] sm:$0xff]
    %v150 = vld [vmem:[%s10 + $0x20] sm:$0xff]
    %v151 = vld [vmem:[%s10 + $0x28] sm:$0xff]
    %v152 = vld [vmem:[%s10 + $0x30] sm:$0xff]
    %v153 = vld [vmem:[%s10 + $0x38] sm:$0xff]
    %v154 = vmul.f32 %v146, 0.999
    %v155 = vmul.f32 %v147, 0.999
    %v156 = vmul.f32 %v148, 0.999
    %v157 = vmul.f32 %v149, 0.999
    %v158 = vmul.f32 %v150, 0.999
    %v159 = vmul.f32 %v151, 0.999
    %v160 = vmul.f32 %v152, 0.999
    %v161 = vmul.f32 %v153, 0.999
    %v162 = vmul.f32 %v101, 0.001
    %v163 = vmul.f32 %v102, 0.001
    %v164 = vmul.f32 %v103, 0.001
    %v165 = vmul.f32 %v104, 0.001
    %v166 = vmul.f32 %v105, 0.001
    %v167 = vmul.f32 %v106, 0.001
    %v168 = vmul.f32 %v107, 0.001
    %v169 = vmul.f32 %v108, 0.001
    %v170 = vadd.f32 %v154, %v162
    %v171 = vadd.f32 %v155, %v163
    %v172 = vadd.f32 %v156, %v164
    %v173 = vadd.f32 %v157, %v165
    %v174 = vadd.f32 %v158, %v166
    %v175 = vadd.f32 %v159, %v167
    %v176 = vadd.f32 %v160, %v168
    %v177 = vadd.f32 %v161, %v169
    %178 = vst.msk [vmem:[%s17] sm:$0xff] %vm135, %v170
    %179 = vst.msk [vmem:[%s17 + $0x8] sm:$0xff] %vm135, %v171
    %180 = vst.msk [vmem:[%s17 + $0x10] sm:$0xff] %vm135, %v172
    %181 = vst.msk [vmem:[%s17 + $0x18] sm:$0xff] %vm135, %v173
    %182 = vst.msk [vmem:[%s17 + $0x20] sm:$0xff] %vm135, %v174
    %183 = vst.msk [vmem:[%s17 + $0x28] sm:$0xff] %vm135, %v175
    %184 = vst.msk [vmem:[%s17 + $0x30] sm:$0xff] %vm135, %v176
    %185 = vst.msk [vmem:[%s17 + $0x38] sm:$0xff] %vm135, %v177
    %v186 = vld [vmem:[%s11] sm:$0x1]
    %v187 = vmul.f32 %v186, 0.999
    %v188 = vmul.f32 %v109, 0.001
    %v189 = vadd.f32 %v187, %v188
    %190 = vst.msk [vmem:[%s18] sm:$0x1] %vm144, %v189
    %v191 = vld [vmem:[%s12] sm:$0xff]
    %v192 = vld [vmem:[%s12 + $0x8] sm:$0xff]
    %v193 = vld [vmem:[%s12 + $0x10] sm:$0xff]
    %v194 = vld [vmem:[%s12 + $0x18] sm:$0xff]
    %v195 = vld [vmem:[%s12 + $0x20] sm:$0xff]
    %v196 = vld [vmem:[%s12 + $0x28] sm:$0xff]
    %v197 = vld [vmem:[%s12 + $0x30] sm:$0xff]
    %v198 = vld [vmem:[%s12 + $0x38] sm:$0xff]
    %v199 = vmul.f32 %v191, 0.999
    %v200 = vmul.f32 %v192, 0.999
    %v201 = vmul.f32 %v193, 0.999
    %v202 = vmul.f32 %v194, 0.999
    %v203 = vmul.f32 %v195, 0.999
    %v204 = vmul.f32 %v196, 0.999
    %v205 = vmul.f32 %v197, 0.999
    %v206 = vmul.f32 %v198, 0.999
    %v207 = vmul.f32 %v110, 0.001
    %v208 = vmul.f32 %v111, 0.001
    %v209 = vmul.f32 %v112, 0.001
    %v210 = vmul.f32 %v113, 0.001
    %v211 = vmul.f32 %v114, 0.001
    %v212 = vmul.f32 %v115, 0.001
    %v213 = vmul.f32 %v116, 0.001
    %v214 = vmul.f32 %v117, 0.001
    %v215 = vadd.f32 %v199, %v207
    %v216 = vadd.f32 %v200, %v208
    %v217 = vadd.f32 %v201, %v209
    %v218 = vadd.f32 %v202, %v210
    %v219 = vadd.f32 %v203, %v211
    %v220 = vadd.f32 %v204, %v212
    %v221 = vadd.f32 %v205, %v213
    %v222 = vadd.f32 %v206, %v214
    %vm223 = vcmask 261120
    %224 = vst.msk [vmem:[%s19] sm:$0xff] %vm223, %v215
    %225 = vst.msk [vmem:[%s19 + $0x8] sm:$0xff] %vm223, %v216
    %226 = vst.msk [vmem:[%s19 + $0x10] sm:$0xff] %vm223, %v217
    %227 = vst.msk [vmem:[%s19 + $0x18] sm:$0xff] %vm223, %v218
    %228 = vst.msk [vmem:[%s19 + $0x20] sm:$0xff] %vm223, %v219
    %229 = vst.msk [vmem:[%s19 + $0x28] sm:$0xff] %vm223, %v220
    %230 = vst.msk [vmem:[%s19 + $0x30] sm:$0xff] %vm223, %v221
    %231 = vst.msk [vmem:[%s19 + $0x38] sm:$0xff] %vm223, %v222
    %v232 = vld [vmem:[%s13] sm:$0x1]
    %v233 = vmul.f32 %v232, 0.999
    %v234 = vmul.f32 %v118, 0.001
    %v235 = vadd.f32 %v233, %v234
    %vm236 = vcmask 253952
    %237 = vst.msk [vmem:[%s20] sm:$0x1] %vm236, %v235
    %v238 = vld [vmem:[#allocation2] sm:$0xff]
    %v239 = vld [vmem:[#allocation2 + $0x8] sm:$0xff]
    %v241 = vlaneseq
    %v242 = vshrl.u32 %v241, 7
    %v243 = vsub.s32 0, %v242
    %v244 = vrot.slane %v100, %v243
    %v247 = vsel %vm223, %v238, 0
    %v250 = vsel %vm223, %v239, 0
    %252 = vmatprep.subr.mxu0 0.0
    %253 = vmatpush1.msra.mxu0 0.0
    %254 = vmatprep.subr.mxu0 0.0
    %255 = vmatpush1.msra.mxu0 0.0
    %256 = vmatprep.subr.mxu0 0.0
    %257 = vmatpush1.msra.mxu0 0.0
    %258 = vmatprep.subr.mxu0 0.0
    %259 = vmatpush1.msra.mxu0 0.0
    %260 = vmatprep.subr.mxu0 0.0
    %261 = vmatpush1.msra.mxu0 0.0
    %262 = vmatprep.subr.mxu0 0.0
    %263 = vmatpush1.msra.mxu0 0.0
    %264 = vmatprep.subr.mxu0 0.0
    %265 = vmatpush1.msra.mxu0 0.0
    %266 = vmatprep.subr.mxu0 0.0
    %267 = vmatpush1.msra.mxu0 0.0
    %268 = vmatprep.subr.mxu0 0.0
    %269 = vmatpush1.msra.mxu0 0.0
    %270 = vmatprep.subr.mxu0 0.0
    %271 = vmatpush1.msra.mxu0 0.0
    %272 = vmatprep.subr.mxu0 0.0
    %273 = vmatpush1.msra.mxu0 0.0
    %274 = vmatprep.subr.mxu0 0.0
    %275 = vmatpush1.msra.mxu0 0.0
    %276 = vmatprep.subr.mxu0 0.0
    %277 = vmatpush1.msra.mxu0 %v99
    %278 = vmatprep.subr.mxu0 0.0
    %279 = vmatpush1.msra.mxu0 %v98
    %280 = vmatprep.subr.mxu0 0.0
    %281 = vmatpush1.msra.mxu0 %v97
    %282 = vmatprep.subr.mxu0 0.0
    %283 = vmatpush1.msra.mxu0 %v96
    %284 = vmatprep.subr.mxu0 0.0
    %285 = vmatpush2.msra.mxu0 0.0
    %286 = vmatprep.subr.mxu0 0.0
    %287 = vmatpush2.msra.mxu0 0.0
    %288 = vmatprep.subr.mxu0 0.0
    %289 = vmatpush2.msra.mxu0 0.0
    %290 = vmatprep.subr.mxu0 0.0
    %291 = vmatpush2.msra.mxu0 0.0
    %292 = vmatprep.subr.mxu0 0.0
    %293 = vmatpush2.msra.mxu0 0.0
    %294 = vmatprep.subr.mxu0 0.0
    %295 = vmatpush2.msra.mxu0 0.0
    %296 = vmatprep.subr.mxu0 0.0
    %297 = vmatpush2.msra.mxu0 0.0
    %298 = vmatprep.subr.mxu0 0.0
    %299 = vmatpush2.msra.mxu0 0.0
    %300 = vmatprep.subr.mxu0 0.0
    %301 = vmatpush2.msra.mxu0 0.0
    %302 = vmatprep.subr.mxu0 0.0
    %303 = vmatpush2.msra.mxu0 0.0
    %304 = vmatprep.subr.mxu0 0.0
    %305 = vmatpush2.msra.mxu0 0.0
    %306 = vmatprep.subr.mxu0 0.0
    %307 = vmatpush2.msra.mxu0 0.0
    %308 = vmatprep.subr.mxu0 0.0
    %309 = vmatpush2.msra.mxu0 0.0
    %310 = vmatprep.subr.mxu0 0.0
    %311 = vmatpush2.msra.mxu0 0.0
    %312 = vmatprep.subr.mxu0 0.0
    %313 = vmatpush2.msra.mxu0 0.0
    %314 = vmatprep.subr.mxu0 0.0
    %315 = vmatpush2.msra.mxu0 0.0
    %316 = vmatprep.mubr.f32.mxu0 0.0
    %317 = vmatmul.mubr.f32.gmra.mxu0 %v247
    %v318 = vpop.f32.mrf.mxu0
    %v319 = vadd.f32 %v244, %v318
    %v320 = vpop.f32.mrf.mxu0
    %321 = vmatprep.mubr.f32.mxu0 0.0
    %322 = vmatmul.mubr.f32.gmra.mxu0 %v250
    %v323 = vpop.f32.mrf.mxu0
    %v324 = vadd.f32 %v244, %v323
    %v325 = vpop.f32.mrf.mxu0
    %326 = vdwg.mxu0
    %v327 = vmax.f32 %v319, 0.0
    %v328 = vmax.f32 %v324, 0.0
    %v330 = vlaneseq
    %v331 = vshrl.u32 %v330, 7
    %v332 = vsub.s32 0, %v331
    %v333 = vrot.slane %v109, %v332
    %v336 = vsel %vm135, %v327, 0
    %v339 = vsel %vm135, %v328, 0
    %341 = vmatprep.subr.mxu0 0.0
    %342 = vmatpush1.msra.mxu0 0.0
    %343 = vmatprep.subr.mxu0 0.0
    %344 = vmatpush1.msra.mxu0 0.0
    %345 = vmatprep.subr.mxu0 0.0
    %346 = vmatpush1.msra.mxu0 0.0
    %347 = vmatprep.subr.mxu0 0.0
    %348 = vmatpush1.msra.mxu0 0.0
    %349 = vmatprep.subr.mxu0 0.0
    %350 = vmatpush1.msra.mxu0 0.0
    %351 = vmatprep.subr.mxu0 0.0
    %352 = vmatpush1.msra.mxu0 0.0
    %353 = vmatprep.subr.mxu0 0.0
    %354 = vmatpush1.msra.mxu0 0.0
    %355 = vmatprep.subr.mxu0 0.0
    %356 = vmatpush1.msra.mxu0 0.0
    %357 = vmatprep.subr.mxu0 0.0
    %358 = vmatpush1.msra.mxu0 %v108
    %359 = vmatprep.subr.mxu0 0.0
    %360 = vmatpush1.msra.mxu0 %v107
    %361 = vmatprep.subr.mxu0 0.0
    %362 = vmatpush1.msra.mxu0 %v106
    %363 = vmatprep.subr.mxu0 0.0
    %364 = vmatpush1.msra.mxu0 %v105
    %365 = vmatprep.subr.mxu0 0.0
    %366 = vmatpush1.msra.mxu0 %v104
    %367 = vmatprep.subr.mxu0 0.0
    %368 = vmatpush1.msra.mxu0 %v103
    %369 = vmatprep.subr.mxu0 0.0
    %370 = vmatpush1.msra.mxu0 %v102
    %371 = vmatprep.subr.mxu0 0.0
    %372 = vmatpush1.msra.mxu0 %v101
    %373 = vmatprep.subr.mxu0 0.0
    %374 = vmatpush2.msra.mxu0 0.0
    %375 = vmatprep.subr.mxu0 0.0
    %376 = vmatpush2.msra.mxu0 0.0
    %377 = vmatprep.subr.mxu0 0.0
    %378 = vmatpush2.msra.mxu0 0.0
    %379 = vmatprep.subr.mxu0 0.0
    %380 = vmatpush2.msra.mxu0 0.0
    %381 = vmatprep.subr.mxu0 0.0
    %382 = vmatpush2.msra.mxu0 0.0
    %383 = vmatprep.subr.mxu0 0.0
    %384 = vmatpush2.msra.mxu0 0.0
    %385 = vmatprep.subr.mxu0 0.0
    %386 = vmatpush2.msra.mxu0 0.0
    %387 = vmatprep.subr.mxu0 0.0
    %388 = vmatpush2.msra.mxu0 0.0
    %389 = vmatprep.subr.mxu0 0.0
    %390 = vmatpush2.msra.mxu0 0.0
    %391 = vmatprep.subr.mxu0 0.0
    %392 = vmatpush2.msra.mxu0 0.0
    %393 = vmatprep.subr.mxu0 0.0
    %394 = vmatpush2.msra.mxu0 0.0
    %395 = vmatprep.subr.mxu0 0.0
    %396 = vmatpush2.msra.mxu0 0.0
    %397 = vmatprep.subr.mxu0 0.0
    %398 = vmatpush2.msra.mxu0 0.0
    %399 = vmatprep.subr.mxu0 0.0
    %400 = vmatpush2.msra.mxu0 0.0
    %401 = vmatprep.subr.mxu0 0.0
    %402 = vmatpush2.msra.mxu0 0.0
    %403 = vmatprep.subr.mxu0 0.0
    %404 = vmatpush2.msra.mxu0 0.0
    %405 = vmatprep.mubr.f32.mxu0 0.0
    %406 = vmatmul.mubr.f32.gmra.mxu0 %v336
    %v407 = vpop.f32.mrf.mxu0
    %v408 = vadd.f32 %v333, %v407
    %v409 = vpop.f32.mrf.mxu0
    %410 = vmatprep.mubr.f32.mxu0 0.0
    %411 = vmatmul.mubr.f32.gmra.mxu0 %v339
    %v412 = vpop.f32.mrf.mxu0
    %v413 = vadd.f32 %v333, %v412
    %v414 = vpop.f32.mrf.mxu0
    %415 = vdwg.mxu0
    %v416 = vmax.f32 %v408, 0.0
    %v417 = vmax.f32 %v413, 0.0
    %v418 = vsel %vm135, %v416, -inf
    %v419 = vrot.slane %v418, 4
    %v420 = vmax.f32 %v418, %v419
    %v421 = vrot.slane %v420, 2
    %v422 = vmax.f32 %v420, %v421
    %v423 = vrot.slane %v422, 1
    %v424 = vmax.f32 %v422, %v423
    %v425 = vsel %vm135, %v417, -inf
    %v426 = vrot.slane %v425, 4
    %v427 = vmax.f32 %v425, %v426
    %v428 = vrot.slane %v427, 2
    %v429 = vmax.f32 %v427, %v428
    %v430 = vrot.slane %v429, 1
    %v431 = vmax.f32 %v429, %v430
    %v433 = vlaneseq
    %v434 = vshrl.u32 %v433, 7
    %v435 = vsub.s32 0, %v434
    %v436 = vrot.slane %v118, %v435
    %vm440 = vcmask 1041409
    %v441 = vsel %vm440, %v431, %v424
    %v442 = vsel %vm135, %v441, 0
    %444 = vmatprep.subr.mxu0 0.0
    %445 = vmatpush1.msra.mxu0 0.0
    %446 = vmatprep.subr.mxu0 0.0
    %447 = vmatpush1.msra.mxu0 0.0
    %448 = vmatprep.subr.mxu0 0.0
    %449 = vmatpush1.msra.mxu0 0.0
    %450 = vmatprep.subr.mxu0 0.0
    %451 = vmatpush1.msra.mxu0 0.0
    %452 = vmatprep.subr.mxu0 0.0
    %453 = vmatpush1.msra.mxu0 0.0
    %454 = vmatprep.subr.mxu0 0.0
    %455 = vmatpush1.msra.mxu0 0.0
    %456 = vmatprep.subr.mxu0 0.0
    %457 = vmatpush1.msra.mxu0 0.0
    %458 = vmatprep.subr.mxu0 0.0
    %459 = vmatpush1.msra.mxu0 0.0
    %460 = vmatprep.subr.mxu0 0.0
    %461 = vmatpush1.msra.mxu0 %v117
    %462 = vmatprep.subr.mxu0 0.0
    %463 = vmatpush1.msra.mxu0 %v116
    %464 = vmatprep.subr.mxu0 0.0
    %465 = vmatpush1.msra.mxu0 %v115
    %466 = vmatprep.subr.mxu0 0.0
    %467 = vmatpush1.msra.mxu0 %v114
    %468 = vmatprep.subr.mxu0 0.0
    %469 = vmatpush1.msra.mxu0 %v113
    %470 = vmatprep.subr.mxu0 0.0
    %471 = vmatpush1.msra.mxu0 %v112
    %472 = vmatprep.subr.mxu0 0.0
    %473 = vmatpush1.msra.mxu0 %v111
    %474 = vmatprep.subr.mxu0 0.0
    %475 = vmatpush1.msra.mxu0 %v110
    %476 = vmatprep.subr.mxu0 0.0
    %477 = vmatpush2.msra.mxu0 0.0
    %478 = vmatprep.subr.mxu0 0.0
    %479 = vmatpush2.msra.mxu0 0.0
    %480 = vmatprep.subr.mxu0 0.0
    %481 = vmatpush2.msra.mxu0 0.0
    %482 = vmatprep.subr.mxu0 0.0
    %483 = vmatpush2.msra.mxu0 0.0
    %484 = vmatprep.subr.mxu0 0.0
    %485 = vmatpush2.msra.mxu0 0.0
    %486 = vmatprep.subr.mxu0 0.0
    %487 = vmatpush2.msra.mxu0 0.0
    %488 = vmatprep.subr.mxu0 0.0
    %489 = vmatpush2.msra.mxu0 0.0
    %490 = vmatprep.subr.mxu0 0.0
    %491 = vmatpush2.msra.mxu0 0.0
    %492 = vmatprep.subr.mxu0 0.0
    %493 = vmatpush2.msra.mxu0 0.0
    %494 = vmatprep.subr.mxu0 0.0
    %495 = vmatpush2.msra.mxu0 0.0
    %496 = vmatprep.subr.mxu0 0.0
    %497 = vmatpush2.msra.mxu0 0.0
    %498 = vmatprep.subr.mxu0 0.0
    %499 = vmatpush2.msra.mxu0 0.0
    %500 = vmatprep.subr.mxu0 0.0
    %501 = vmatpush2.msra.mxu0 0.0
    %502 = vmatprep.subr.mxu0 0.0
    %503 = vmatpush2.msra.mxu0 0.0
    %504 = vmatprep.subr.mxu0 0.0
    %505 = vmatpush2.msra.mxu0 0.0
    %506 = vmatprep.subr.mxu0 0.0
    %507 = vmatpush2.msra.mxu0 0.0
    %508 = vmatprep.mubr.f32.mxu0 0.0
    %509 = vmatmul.mubr.f32.gmra.mxu0 %v442
    %v510 = vpop.f32.mrf.mxu0
    %v511 = vadd.f32 %v436, %v510
    %v512 = vpop.f32.mrf.mxu0
    %513 = vdwg.mxu0
    %v514 = vld [vmem:[#allocation5] sm:$0xff]
    %v515 = vld [vmem:[#allocation5 + $0x8] sm:$0xff]
    %v517 = vlaneseq
    %v518 = vshrl.u32 %v517, 7
    %v519 = vsub.s32 0, %v518
    %v520 = vrot.slane %v143, %v519
    %v523 = vsel %vm223, %v514, 0
    %v526 = vsel %vm223, %v515, 0
    %528 = vmatprep.subr.mxu0 0.0
    %529 = vmatpush1.msra.mxu0 0.0
    %530 = vmatprep.subr.mxu0 0.0
    %531 = vmatpush1.msra.mxu0 0.0
    %532 = vmatprep.subr.mxu0 0.0
    %533 = vmatpush1.msra.mxu0 0.0
    %534 = vmatprep.subr.mxu0 0.0
    %535 = vmatpush1.msra.mxu0 0.0
    %536 = vmatprep.subr.mxu0 0.0
    %537 = vmatpush1.msra.mxu0 0.0
    %538 = vmatprep.subr.mxu0 0.0
    %539 = vmatpush1.msra.mxu0 0.0
    %540 = vmatprep.subr.mxu0 0.0
    %541 = vmatpush1.msra.mxu0 0.0
    %542 = vmatprep.subr.mxu0 0.0
    %543 = vmatpush1.msra.mxu0 0.0
    %544 = vmatprep.subr.mxu0 0.0
    %545 = vmatpush1.msra.mxu0 0.0
    %546 = vmatprep.subr.mxu0 0.0
    %547 = vmatpush1.msra.mxu0 0.0
    %548 = vmatprep.subr.mxu0 0.0
    %549 = vmatpush1.msra.mxu0 0.0
    %550 = vmatprep.subr.mxu0 0.0
    %551 = vmatpush1.msra.mxu0 0.0
    %552 = vmatprep.subr.mxu0 0.0
    %553 = vmatpush1.msra.mxu0 %v134
    %554 = vmatprep.subr.mxu0 0.0
    %555 = vmatpush1.msra.mxu0 %v133
    %556 = vmatprep.subr.mxu0 0.0
    %557 = vmatpush1.msra.mxu0 %v132
    %558 = vmatprep.subr.mxu0 0.0
    %559 = vmatpush1.msra.mxu0 %v131
    %560 = vmatprep.subr.mxu0 0.0
    %561 = vmatpush2.msra.mxu0 0.0
    %562 = vmatprep.subr.mxu0 0.0
    %563 = vmatpush2.msra.mxu0 0.0
    %564 = vmatprep.subr.mxu0 0.0
    %565 = vmatpush2.msra.mxu0 0.0
    %566 = vmatprep.subr.mxu0 0.0
    %567 = vmatpush2.msra.mxu0 0.0
    %568 = vmatprep.subr.mxu0 0.0
    %569 = vmatpush2.msra.mxu0 0.0
    %570 = vmatprep.subr.mxu0 0.0
    %571 = vmatpush2.msra.mxu0 0.0
    %572 = vmatprep.subr.mxu0 0.0
    %573 = vmatpush2.msra.mxu0 0.0
    %574 = vmatprep.subr.mxu0 0.0
    %575 = vmatpush2.msra.mxu0 0.0
    %576 = vmatprep.subr.mxu0 0.0
    %577 = vmatpush2.msra.mxu0 0.0
    %578 = vmatprep.subr.mxu0 0.0
    %579 = vmatpush2.msra.mxu0 0.0
    %580 = vmatprep.subr.mxu0 0.0
    %581 = vmatpush2.msra.mxu0 0.0
    %582 = vmatprep.subr.mxu0 0.0
    %583 = vmatpush2.msra.mxu0 0.0
    %584 = vmatprep.subr.mxu0 0.0
    %585 = vmatpush2.msra.mxu0 0.0
    %586 = vmatprep.subr.mxu0 0.0
    %587 = vmatpush2.msra.mxu0 0.0
    %588 = vmatprep.subr.mxu0 0.0
    %589 = vmatpush2.msra.mxu0 0.0
    %590 = vmatprep.subr.mxu0 0.0
    %591 = vmatpush2.msra.mxu0 0.0
    %592 = vmatprep.mubr.f32.mxu0 0.0
    %593 = vmatmul.mubr.f32.gmra.mxu0 %v523
    %v594 = vpop.f32.mrf.mxu0
    %v595 = vadd.f32 %v520, %v594
    %v596 = vpop.f32.mrf.mxu0
    %597 = vmatprep.mubr.f32.mxu0 0.0
    %598 = vmatmul.mubr.f32.gmra.mxu0 %v526
    %v599 = vpop.f32.mrf.mxu0
    %v600 = vadd.f32 %v520, %v599
    %v601 = vpop.f32.mrf.mxu0
    %602 = vdwg.mxu0
    %v603 = vmax.f32 %v595, 0.0
    %v604 = vmax.f32 %v600, 0.0
    %v606 = vlaneseq
    %v607 = vshrl.u32 %v606, 7
    %v608 = vsub.s32 0, %v607
    %v609 = vrot.slane %v189, %v608
    %v612 = vsel %vm135, %v603, 0
    %v615 = vsel %vm135, %v604, 0
    %617 = vmatprep.subr.mxu0 0.0
    %618 = vmatpush1.msra.mxu0 0.0
    %619 = vmatprep.subr.mxu0 0.0
    %620 = vmatpush1.msra.mxu0 0.0
    %621 = vmatprep.subr.mxu0 0.0
    %622 = vmatpush1.msra.mxu0 0.0
    %623 = vmatprep.subr.mxu0 0.0
    %624 = vmatpush1.msra.mxu0 0.0
    %625 = vmatprep.subr.mxu0 0.0
    %626 = vmatpush1.msra.mxu0 0.0
    %627 = vmatprep.subr.mxu0 0.0
    %628 = vmatpush1.msra.mxu0 0.0
    %629 = vmatprep.subr.mxu0 0.0
    %630 = vmatpush1.msra.mxu0 0.0
    %631 = vmatprep.subr.mxu0 0.0
    %632 = vmatpush1.msra.mxu0 0.0
    %633 = vmatprep.subr.mxu0 0.0
    %634 = vmatpush1.msra.mxu0 %v177
    %635 = vmatprep.subr.mxu0 0.0
    %636 = vmatpush1.msra.mxu0 %v176
    %637 = vmatprep.subr.mxu0 0.0
    %638 = vmatpush1.msra.mxu0 %v175
    %639 = vmatprep.subr.mxu0 0.0
    %640 = vmatpush1.msra.mxu0 %v174
    %641 = vmatprep.subr.mxu0 0.0
    %642 = vmatpush1.msra.mxu0 %v173
    %643 = vmatprep.subr.mxu0 0.0
    %644 = vmatpush1.msra.mxu0 %v172
    %645 = vmatprep.subr.mxu0 0.0
    %646 = vmatpush1.msra.mxu0 %v171
    %647 = vmatprep.subr.mxu0 0.0
    %648 = vmatpush1.msra.mxu0 %v170
    %649 = vmatprep.subr.mxu0 0.0
    %650 = vmatpush2.msra.mxu0 0.0
    %651 = vmatprep.subr.mxu0 0.0
    %652 = vmatpush2.msra.mxu0 0.0
    %653 = vmatprep.subr.mxu0 0.0
    %654 = vmatpush2.msra.mxu0 0.0
    %655 = vmatprep.subr.mxu0 0.0
    %656 = vmatpush2.msra.mxu0 0.0
    %657 = vmatprep.subr.mxu0 0.0
    %658 = vmatpush2.msra.mxu0 0.0
    %659 = vmatprep.subr.mxu0 0.0
    %660 = vmatpush2.msra.mxu0 0.0
    %661 = vmatprep.subr.mxu0 0.0
    %662 = vmatpush2.msra.mxu0 0.0
    %663 = vmatprep.subr.mxu0 0.0
    %664 = vmatpush2.msra.mxu0 0.0
    %665 = vmatprep.subr.mxu0 0.0
    %666 = vmatpush2.msra.mxu0 0.0
    %667 = vmatprep.subr.mxu0 0.0
    %668 = vmatpush2.msra.mxu0 0.0
    %669 = vmatprep.subr.mxu0 0.0
    %670 = vmatpush2.msra.mxu0 0.0
    %671 = vmatprep.subr.mxu0 0.0
    %672 = vmatpush2.msra.mxu0 0.0
    %673 = vmatprep.subr.mxu0 0.0
    %674 = vmatpush2.msra.mxu0 0.0
    %675 = vmatprep.subr.mxu0 0.0
    %676 = vmatpush2.msra.mxu0 0.0
    %677 = vmatprep.subr.mxu0 0.0
    %678 = vmatpush2.msra.mxu0 0.0
    %679 = vmatprep.subr.mxu0 0.0
    %680 = vmatpush2.msra.mxu0 0.0
    %681 = vmatprep.mubr.f32.mxu0 0.0
    %682 = vmatmul.mubr.f32.gmra.mxu0 %v612
    %v683 = vpop.f32.mrf.mxu0
    %v684 = vadd.f32 %v609, %v683
    %v685 = vpop.f32.mrf.mxu0
    %686 = vmatprep.mubr.f32.mxu0 0.0
    %687 = vmatmul.mubr.f32.gmra.mxu0 %v615
    %v688 = vpop.f32.mrf.mxu0
    %v689 = vadd.f32 %v609, %v688
    %v690 = vpop.f32.mrf.mxu0
    %691 = vdwg.mxu0
    %v692 = vmax.f32 %v684, 0.0
    %v693 = vmax.f32 %v689, 0.0
    %v694 = vsel %vm135, %v692, -inf
    %v695 = vrot.slane %v694, 4
    %v696 = vmax.f32 %v694, %v695
    %v697 = vrot.slane %v696, 2
    %v698 = vmax.f32 %v696, %v697
    %v699 = vrot.slane %v698, 1
    %v700 = vmax.f32 %v698, %v699
    %v701 = vsel %vm135, %v693, -inf
    %v702 = vrot.slane %v701, 4
    %v703 = vmax.f32 %v701, %v702
    %v704 = vrot.slane %v703, 2
    %v705 = vmax.f32 %v703, %v704
    %v706 = vrot.slane %v705, 1
    %v707 = vmax.f32 %v705, %v706
    %v709 = vlaneseq
    %v710 = vshrl.u32 %v709, 7
    %v711 = vsub.s32 0, %v710
    %v712 = vrot.slane %v235, %v711
    %v716 = vsel %vm440, %v707, %v700
    %v717 = vsel %vm135, %v716, 0
    %719 = vmatprep.subr.mxu0 0.0
    %720 = vmatpush1.msra.mxu0 0.0
    %721 = vmatprep.subr.mxu0 0.0
    %722 = vmatpush1.msra.mxu0 0.0
    %723 = vmatprep.subr.mxu0 0.0
    %724 = vmatpush1.msra.mxu0 0.0
    %725 = vmatprep.subr.mxu0 0.0
    %726 = vmatpush1.msra.mxu0 0.0
    %727 = vmatprep.subr.mxu0 0.0
    %728 = vmatpush1.msra.mxu0 0.0
    %729 = vmatprep.subr.mxu0 0.0
    %730 = vmatpush1.msra.mxu0 0.0
    %731 = vmatprep.subr.mxu0 0.0
    %732 = vmatpush1.msra.mxu0 0.0
    %733 = vmatprep.subr.mxu0 0.0
    %734 = vmatpush1.msra.mxu0 0.0
    %735 = vmatprep.subr.mxu0 0.0
    %736 = vmatpush1.msra.mxu0 %v222
    %737 = vmatprep.subr.mxu0 0.0
    %738 = vmatpush1.msra.mxu0 %v221
    %739 = vmatprep.subr.mxu0 0.0
    %740 = vmatpush1.msra.mxu0 %v220
    %741 = vmatprep.subr.mxu0 0.0
    %742 = vmatpush1.msra.mxu0 %v219
    %743 = vmatprep.subr.mxu0 0.0
    %744 = vmatpush1.msra.mxu0 %v218
    %745 = vmatprep.subr.mxu0 0.0
    %746 = vmatpush1.msra.mxu0 %v217
    %747 = vmatprep.subr.mxu0 0.0
    %748 = vmatpush1.msra.mxu0 %v216
    %749 = vmatprep.subr.mxu0 0.0
    %750 = vmatpush1.msra.mxu0 %v215
    %751 = vmatprep.subr.mxu0 0.0
    %752 = vmatpush2.msra.mxu0 0.0
    %753 = vmatprep.subr.mxu0 0.0
    %754 = vmatpush2.msra.mxu0 0.0
    %755 = vmatprep.subr.mxu0 0.0
    %756 = vmatpush2.msra.mxu0 0.0
    %757 = vmatprep.subr.mxu0 0.0
    %758 = vmatpush2.msra.mxu0 0.0
    %759 = vmatprep.subr.mxu0 0.0
    %760 = vmatpush2.msra.mxu0 0.0
    %761 = vmatprep.subr.mxu0 0.0
    %762 = vmatpush2.msra.mxu0 0.0
    %763 = vmatprep.subr.mxu0 0.0
    %764 = vmatpush2.msra.mxu0 0.0
    %765 = vmatprep.subr.mxu0 0.0
    %766 = vmatpush2.msra.mxu0 0.0
    %767 = vmatprep.subr.mxu0 0.0
    %768 = vmatpush2.msra.mxu0 0.0
    %769 = vmatprep.subr.mxu0 0.0
    %770 = vmatpush2.msra.mxu0 0.0
    %771 = vmatprep.subr.mxu0 0.0
    %772 = vmatpush2.msra.mxu0 0.0
    %773 = vmatprep.subr.mxu0 0.0
    %774 = vmatpush2.msra.mxu0 0.0
    %775 = vmatprep.subr.mxu0 0.0
    %776 = vmatpush2.msra.mxu0 0.0
    %777 = vmatprep.subr.mxu0 0.0
    %778 = vmatpush2.msra.mxu0 0.0
    %779 = vmatprep.subr.mxu0 0.0
    %780 = vmatpush2.msra.mxu0 0.0
    %781 = vmatprep.subr.mxu0 0.0
    %782 = vmatpush2.msra.mxu0 0.0
    %783 = vmatprep.mubr.f32.mxu0 0.0
    %784 = vmatmul.mubr.f32.gmra.mxu0 %v717
    %v785 = vpop.f32.mrf.mxu0
    %v786 = vadd.f32 %v712, %v785
    %v787 = vpop.f32.mrf.mxu0
    %788 = vdwg.mxu0
    %vm789 = vcmask 254976
    %790 = vst.msk [vmem:[%s14] sm:$0x3] %vm789, %v511
    %s791 = scalar_lea.vmem %s14, 2
    %792 = vst.msk [vmem:[%s791] sm:$0x3] %vm789, %v786
    // Predicated region
    $region70: #{fused_pair_forward.1} parent=1 // pred_check
      _
    $region71: #{fused_pair_forward.1} parent=1 // pred_check_branch
      %794 = sbr.rel (0) target = $region73
    $region72: #{fused_pair_forward.1} parent=1 // pred_region
      _
    $region73: #{fused_pair_forward.1} parent=1 // pred_fallthru
      _
    // Predicated region
    $region74: #{fused_pair_forward.1} parent=1 // pred_check
      _
    $region75: #{fused_pair_forward.1} parent=1 // pred_check_branch
      %796 = sbr.rel (0) target = $region77
    $region76: #{fused_pair_forward.1} parent=1 // pred_region
      %s798 = ssub.s32 512, 512
      %799 = vsyncadd [#allocation4], %s798
      %s800 = sshll.u32 [#allocation8], 4
      %s801 = int_to_ptr.vmem [resolvable:$true] %s800
      %806 = dma.vmem_to_hbm [thread:$0]  %s801, 512, %s15, [#allocation4], 128, 128, 8
    $region77: #{fused_pair_forward.1} parent=1 // pred_fallthru
      _
    // Predicated region
    $region78: #{fused_pair_forward.1} parent=1 // pred_check
      _
    $region79: #{fused_pair_forward.1} parent=1 // pred_check_branch
      %808 = sbr.rel (0) target = $region81
    $region80: #{fused_pair_forward.1} parent=1 // pred_region
      _
    $region81: #{fused_pair_forward.1} parent=1 // pred_fallthru
      _
    // Predicated region
    $region82: #{fused_pair_forward.1} parent=1 // pred_check
      _
    $region83: #{fused_pair_forward.1} parent=1 // pred_check_branch
      %810 = sbr.rel (0) target = $region85
    $region84: #{fused_pair_forward.1} parent=1 // pred_region
      _
    $region85: #{fused_pair_forward.1} parent=1 // pred_fallthru
      _
    // Predicated region
    $region86: #{fused_pair_forward.1} parent=1 // pred_check
      _
    $region87: #{fused_pair_forward.1} parent=1 // pred_check_branch
      %812 = sbr.rel (0) target = $region89
    $region88: #{fused_pair_forward.1} parent=1 // pred_region
      _
    $region89: #{fused_pair_forward.1} parent=1 // pred_fallthru
      _
    // Predicated region
    $region90: #{fused_pair_forward.1} parent=1 // pred_check
      _
    $region91: #{fused_pair_forward.1} parent=1 // pred_check_branch
      %814 = sbr.rel (0) target = $region93
    $region92: #{fused_pair_forward.1} parent=1 // pred_region
      _
    $region93: #{fused_pair_forward.1} parent=1 // pred_fallthru
      _
    // Predicated region
    $region94: #{fused_pair_forward.1} parent=1 // pred_check
      _
    $region95: #{fused_pair_forward.1} parent=1 // pred_check_branch
      %816 = sbr.rel (0) target = $region97
    $region96: #{fused_pair_forward.1} parent=1 // pred_region
      _
    $region97: #{fused_pair_forward.1} parent=1 // pred_fallthru
      _
    // Predicated region
    $region98: #{fused_pair_forward.1} parent=1 // pred_check
      _
    $region99: #{fused_pair_forward.1} parent=1 // pred_check_branch
      %818 = sbr.rel (0) target = $region101
    $region100: #{fused_pair_forward.1} parent=1 // pred_region
      _
    $region101: #{fused_pair_forward.1} parent=1 // pred_fallthru
      _
    // Predicated region
    $region102: #{fused_pair_forward.1} parent=1 // pred_check
      _
    $region103: #{fused_pair_forward.1} parent=1 // pred_check_branch
      %820 = sbr.rel (0) target = $region105
    $region104: #{fused_pair_forward.1} parent=1 // pred_region
      %821 = dma.done [#allocation4], 512
    $region105: #{fused_pair_forward.1} parent=1 // pred_fallthru
      _
    // Predicated region
    $region106: #{fused_pair_forward.1} parent=1 // pred_check
      _
    $region107: #{fused_pair_forward.1} parent=1 // pred_check_branch
      %823 = sbr.rel (0) target = $region109
    $region108: #{fused_pair_forward.1} parent=1 // pred_region
      _
    $region109: #{fused_pair_forward.1} parent=1 // pred_fallthru
      _
    // Predicated region
    $region110: #{fused_pair_forward.1} parent=1 // pred_check
      _
    $region111: #{fused_pair_forward.1} parent=1 // pred_check_branch
      %825 = sbr.rel (0) target = $region113
    $region112: #{fused_pair_forward.1} parent=1 // pred_region
      _
    $region113: #{fused_pair_forward.1} parent=1 // pred_fallthru
      _
    // Predicated region
    $region114: #{fused_pair_forward.1} parent=1 // pred_check
      _
    $region115: #{fused_pair_forward.1} parent=1 // pred_check_branch
      %827 = sbr.rel (0) target = $region117
    $region116: #{fused_pair_forward.1} parent=1 // pred_region
      _
    $region117: #{fused_pair_forward.1} parent=1 // pred_fallthru
      _
    // Predicated region
    $region118: #{fused_pair_forward.1} parent=1 // pred_check
      _
    $region119: #{fused_pair_forward.1} parent=1 // pred_check_branch
      %829 = sbr.rel (0) target = $region121
    $region120: #{fused_pair_forward.1} parent=1 // pred_region
      _
    $region121: #{fused_pair_forward.1} parent=1 // pred_fallthru
      _
    // Predicated region
    $region122: #{fused_pair_forward.1} parent=1 // pred_check
      _
    $region123: #{fused_pair_forward.1} parent=1 // pred_check_branch
      %831 = sbr.rel (0) target = $region125
    $region124: #{fused_pair_forward.1} parent=1 // pred_region
      _
    $region125: #{fused_pair_forward.1} parent=1 // pred_fallthru
      _
    %832 = vsyncpa [#allocation3], 1
    %833 = vsyncpa [#allocation6], 1
    %834 = vsyncpa [#allocation4], 1

</llo_original>
